<compile_context>
chip_gen: v7x
topology: tpu7x:2x2x1
jax: 0.10.0
libtpu: 0.0.40
codegen_flags: <defaults>
</compile_context>

<pallas_src>
import functools
import math

import jax
import jax.numpy as jnp
from jax import lax
from jax.experimental import pallas as pl
from jax.experimental.pallas import tpu as pltpu


def _round_up(x, m):
    return ((x + m - 1) // m) * m


def odeflow_kernel(n_steps_ref, txy_ref, params_ref, out_ref,
                   *, dt, d, h, compute_dtype):
    """One row-tile of the Euler flow, feature-major layout [1+D, TILE_N].

    n_steps_ref : SMEM scalar-prefetch, (1,) int32 — global ceil(max(t)/dt).
    txy_ref     : [1+D, T] VMEM tile (rows on lanes).
    params_ref  : [H, 2D+3] packed parameters: [W1^T | b1 | W2 | b2-column].
    out_ref     : [1+D, T] output tile.
    """
    f = d + 1
    txy = txy_ref[...]                                   # [1+D, T]
    t_row = txy[0:1, :]                                  # [1, T]
    y0 = txy[1:1 + d, :]                                 # [D, T] coordinate slab

    # ---- loop-invariant parameter slices: keep as [H,1]/[D,1] columns only;
    # ---- broadcasting happens implicitly (transiently) inside the multiplies.
    P = params_ref[...]                                  # [H, 2D+3]
    cdt = compute_dtype
    w1_t = P[:, 0:1].astype(cdt)                         # [H, 1] time col of W1^T
    w1_y = [P[:, 1 + j:2 + j].astype(cdt) for j in range(d)]   # D x [H, 1]
    b1_c = P[:, f:f + 1].astype(cdt)                     # [H, 1]
    w2_c = [P[:, f + 1 + j:f + 2 + j].astype(cdt) for j in range(d)]  # D x [H, 1]
    b2_c = P[0:d, f + 1 + d:f + 2 + d]                   # [D, 1] (f32)

    dt_f = jnp.float32(dt)

    def euler_step(k, y):
        # left (larger) grid time of this step for every row
        s = t_row - k.astype(jnp.float32) * dt_f         # [1, T]
        active = s > 0.0                                 # rows with steps left
        hstep = jnp.minimum(dt_f, s)                     # final step may be short

        # hidden layer: [s, y] @ W1 + b1 as VPU broadcast-MACs (K = 1+D tiny,
        # kept off the MXU).  [H,1] * [1,T] broadcasts stay transient.
        s_c = s.astype(cdt)
        y_c = y.astype(cdt)
        pre = b1_c + w1_t * s_c                          # [H, T]
        for j in range(d):
            pre = pre + w1_y[j] * y_c[j:j + 1, :]
        hid = jnp.tanh(pre)                              # [H, T]  (EUP)

        # output layer: hid @ W2 + b2 as VPU multiply + sublane (XLU) reduce.
        v_rows = [
            jnp.sum((w2_c[j] * hid).astype(jnp.float32), axis=0, keepdims=True)
            for j in range(d)
        ]
        v = jnp.concatenate(v_rows, axis=0) + b2_c       # [D, T] f32

        # backwards-in-time Euler update, masked once on the whole slab
        y_new = y - hstep * v                            # [D, T]
        return jnp.where(active, y_new, y)

    n_steps = jnp.maximum(n_steps_ref[0], 0)             # dynamic SMEM bound
    y = lax.fori_loop(0, n_steps, euler_step, y0)

    # two lane-dense row stores; no concatenate / relayout
    out_ref[0:1, :] = t_row
    out_ref[1:1 + d, :] = y


def ode_flow_feature_major(txy_fm, w1, b1, w2, b2, *, dt=0.05, tile_n=1024,
                           compute_dtype=jnp.float32):
    """Feature-major ODEFlow forward: txy_fm is [1+D, N], returns [1+D, N].

    Use this entry point directly to avoid any transpose plumbing when the
    caller already keeps data feature-major (batch on the minor axis).
    """
    f, n = txy_fm.shape
    d = f - 1
    h = w1.shape[1]

    # lane tile: multiple of 128, as large as possible, but keep >= 2 grid
    # steps when N allows so the "parallel" axis spans both v7x TensorCores.
    tile = _round_up(min(int(tile_n), n), 128)
    if n > 128:
        tile = min(tile, _round_up(-(-n // 2), 128))
    n_pad = _round_up(n, tile)
    x = txy_fm if n_pad == n else jnp.pad(txy_fm, ((0, 0), (0, n_pad - n)))

    # pack W1^T | b1 | W2 | b2-column into one [H, 2D+3] resident block
    b2_col = jnp.pad(jnp.reshape(b2, (d, 1)), ((0, h - d), (0, 0)))
    params = jnp.concatenate(
        [jnp.transpose(w1), jnp.reshape(b1, (h, 1)), w2, b2_col], axis=1)
    pcols = f + 1 + d + 1

    # dynamic step count (device-side, no host sync): ceil(max(t) / dt)
    n_steps = jnp.maximum(
        jnp.ceil(jnp.max(txy_fm[0, :]) / jnp.float32(dt) - 1e-6), 0.0
    ).astype(jnp.int32).reshape((1,))

    kernel = functools.partial(odeflow_kernel, dt=float(dt), d=d, h=h,
                               compute_dtype=compute_dtype)

    out = pl.pallas_call(
        kernel,
        out_shape=jax.ShapeDtypeStruct((f, n_pad), jnp.float32),
        grid_spec=pltpu.PrefetchScalarGridSpec(
            num_scalar_prefetch=1,                         # n_steps -> SMEM
            grid=(n_pad // tile,),
            in_specs=[
                pl.BlockSpec((f, tile), lambda i, ns: (0, i)),   # TXY row tile
                pl.BlockSpec((h, pcols), lambda i, ns: (0, 0)),  # packed params
            ],
            out_specs=pl.BlockSpec((f, tile), lambda i, ns: (0, i)),
        ),
        compiler_params=pltpu.CompilerParams(
            dimension_semantics=("parallel",)),            # dual-TC on v7x
    )(n_steps, x, params)

    return out[:, :n]


@functools.partial(jax.jit, static_argnames=("dt", "tile_n", "compute_dtype"))
def ode_flow(txy, w1, b1, w2, b2, *, dt=0.05, tile_n=1024,
             compute_dtype=jnp.float32):
    """Row-major convenience wrapper matching the PyTorch module: [N, 1+D].

    Jitted so the pad/transpose layout plumbing fuses into one XLA program.
    """
    out_fm = ode_flow_feature_major(jnp.transpose(txy), w1, b1, w2, b2,
                                    dt=dt, tile_n=tile_n,
                                    compute_dtype=compute_dtype)
    return jnp.transpose(out_fm)


if __name__ == "__main__":
    N, D, H = 1024, 2, 32       # 1024 points, 2-D coordinates, hidden width 32
    dt = 0.05

    key = jax.random.PRNGKey(0)
    k_t, k_xy, k_w1, k_b1, k_w2, k_b2 = jax.random.split(key, 6)

    # times: a few distinct multiples of dt, including t == 0
    t_choices = jnp.array([0.0, 0.05, 0.10, 0.15], dtype=jnp.float32)
    t_idx = jax.random.randint(k_t, (N,), 0, t_choices.shape[0])
    t_col = t_choices[t_idx][:, None]                          # [N, 1]
    xy = jax.random.normal(k_xy, (N, D), dtype=jnp.float32)    # [N, D]
    txy = jnp.concatenate([t_col, xy], axis=-1)                # [N, 1+D]

    # deterministic velocity-MLP parameters
    w1 = 0.5 * jax.random.normal(k_w1, (1 + D, H), dtype=jnp.float32)
    b1 = 0.1 * jax.random.normal(k_b1, (1, H), dtype=jnp.float32)
    w2 = 0.5 * jax.random.normal(k_w2, (H, D), dtype=jnp.float32)
    b2 = 0.1 * jax.random.normal(k_b2, (1, D), dtype=jnp.float32)

    ta = ode_flow(txy, w1, b1, w2, b2, dt=dt)
    jax.block_until_ready(ta)

    # ---- pure-JAX reference (row-major, standard matmul formulation) ----
    def reference(txy_in, n_ref_steps):
        t = txy_in[:, 0:1]
        y = txy_in[:, 1:]
        dtf = jnp.float32(dt)
        for k in range(n_ref_steps):
            s = t - jnp.float32(k) * dtf
            active = s > 0.0
            hstep = jnp.minimum(dtf, s)
            inp = jnp.concatenate([s, y], axis=-1)
            v = jnp.tanh(inp @ w1 + b1) @ w2 + b2
            y = jnp.where(active, y - hstep * v, y)
        return jnp.concatenate([t, y], axis=-1)

    n_ref_steps = int(math.ceil(0.15 / dt - 1e-9))   # exact step count for this data
    ref = reference(txy, n_ref_steps)

    assert ta.shape == txy.shape
    assert jnp.allclose(ta, ref, atol=1e-5, rtol=1e-5)
    assert jnp.allclose(ta[:, 0], txy[:, 0])               # time column preserved
    zero_rows = txy[:, 0] == 0.0
    assert jnp.allclose(ta[zero_rows], txy[zero_rows])     # t == 0 rows are identity

    print("KERNEL_OK")
</pallas_src>

<mosaic_0001>
module attributes {stable_mosaic.version = 11 : i64} {
  func.func @odeflow_kernel(%arg0: i32, %arg1: memref<1xi32, #tpu.memory_space<smem>>, %arg2: memref<3x512xf32, #tpu.memory_space<vmem>>, %arg3: memref<32x7xf32, #tpu.memory_space<vmem>>, %arg4: memref<3x512xf32, #tpu.memory_space<vmem>>) attributes {dimension_semantics = [#tpu.dimension_semantics<parallel>], iteration_bounds = array<i64: 2>, scalar_prefetch = 1 : i64, scratch_operands = 0 : i64, tpu.core_type = #tpu.core_type<tc>, window_params = [{transform_indices = @transform_0, window_bounds = array<i64: 3, 512>}, {pipeline_mode = #tpu.pipeline_mode<synchronous>, transform_indices = @transform_1, window_bounds = array<i64: 32, 7>}, {transform_indices = @transform_2, window_bounds = array<i64: 3, 512>}]} {
    %c0 = arith.constant 0 : index
    %c0_0 = arith.constant 0 : index
    %0 = vector.load %arg2[%c0, %c0_0] : memref<3x512xf32, #tpu.memory_space<vmem>>, vector<3x512xf32>
    %1 = vector.extract_strided_slice %0 {offsets = [0, 0], sizes = [1, 512], strides = [1, 1]} : vector<3x512xf32> to vector<1x512xf32>
    %2 = vector.extract_strided_slice %0 {offsets = [1, 0], sizes = [2, 512], strides = [1, 1]} : vector<3x512xf32> to vector<2x512xf32>
    %c0_1 = arith.constant 0 : index
    %c0_2 = arith.constant 0 : index
    %3 = vector.load %arg3[%c0_1, %c0_2] : memref<32x7xf32, #tpu.memory_space<vmem>>, vector<32x7xf32>
    %4 = vector.extract_strided_slice %3 {offsets = [0, 0], sizes = [32, 1], strides = [1, 1]} : vector<32x7xf32> to vector<32x1xf32>
    %5 = vector.extract_strided_slice %3 {offsets = [0, 1], sizes = [32, 1], strides = [1, 1]} : vector<32x7xf32> to vector<32x1xf32>
    %6 = vector.extract_strided_slice %3 {offsets = [0, 2], sizes = [32, 1], strides = [1, 1]} : vector<32x7xf32> to vector<32x1xf32>
    %7 = vector.extract_strided_slice %3 {offsets = [0, 3], sizes = [32, 1], strides = [1, 1]} : vector<32x7xf32> to vector<32x1xf32>
    %8 = vector.extract_strided_slice %3 {offsets = [0, 4], sizes = [32, 1], strides = [1, 1]} : vector<32x7xf32> to vector<32x1xf32>
    %9 = vector.extract_strided_slice %3 {offsets = [0, 5], sizes = [32, 1], strides = [1, 1]} : vector<32x7xf32> to vector<32x1xf32>
    %10 = vector.extract_strided_slice %3 {offsets = [0, 6], sizes = [2, 1], strides = [1, 1]} : vector<32x7xf32> to vector<2x1xf32>
    %c0_3 = arith.constant 0 : index
    %11 = memref.load %arg1[%c0_3] : memref<1xi32, #tpu.memory_space<smem>>
    %c0_i32 = arith.constant 0 : i32
    %12 = arith.maxsi %11, %c0_i32 : i32
    %cst = arith.constant 5.000000e-02 : f32
    %c0_i32_4 = arith.constant 0 : i32
    %13 = arith.subi %12, %c0_i32_4 : i32
    %14 = arith.addi %c0_i32_4, %13 : i32
    %c1_i32 = arith.constant 1 : i32
    %15 = scf.for %arg5 = %c0_i32_4 to %14 step %c1_i32 iter_args(%arg6 = %2) -> (vector<2x512xf32>)  : i32 {
      %18 = arith.sitofp %arg5 : i32 to f32
      %19 = arith.mulf %18, %cst : f32
      %20 = vector.broadcast %19 : f32 to vector<1x512xf32>
      %21 = arith.subf %1, %20 : vector<1x512xf32>
      %cst_8 = arith.constant 0.000000e+00 : f32
      %22 = vector.broadcast %cst_8 : f32 to vector<1x512xf32>
      %23 = arith.cmpf ogt, %21, %22 : vector<1x512xf32>
      %24 = vector.broadcast %cst : f32 to vector<1x512xf32>
      %25 = arith.minimumf %24, %21 : vector<1x512xf32>
      %26 = vector.broadcast %4 : vector<32x1xf32> to vector<32x512xf32>
      %27 = vector.broadcast %21 : vector<1x512xf32> to vector<32x512xf32>
      %28 = arith.mulf %26, %27 : vector<32x512xf32>
      %29 = vector.broadcast %7 : vector<32x1xf32> to vector<32x512xf32>
      %30 = arith.addf %29, %28 : vector<32x512xf32>
      %31 = vector.extract_strided_slice %arg6 {offsets = [0, 0], sizes = [1, 512], strides = [1, 1]} : vector<2x512xf32> to vector<1x512xf32>
      %32 = vector.broadcast %5 : vector<32x1xf32> to vector<32x512xf32>
      %33 = vector.broadcast %31 : vector<1x512xf32> to vector<32x512xf32>
      %34 = arith.mulf %32, %33 : vector<32x512xf32>
      %35 = arith.addf %30, %34 : vector<32x512xf32>
      %36 = vector.extract_strided_slice %arg6 {offsets = [1, 0], sizes = [1, 512], strides = [1, 1]} : vector<2x512xf32> to vector<1x512xf32>
      %37 = vector.broadcast %6 : vector<32x1xf32> to vector<32x512xf32>
      %38 = vector.broadcast %36 : vector<1x512xf32> to vector<32x512xf32>
      %39 = arith.mulf %37, %38 : vector<32x512xf32>
      %40 = arith.addf %35, %39 : vector<32x512xf32>
      %41 = math.tanh %40 : vector<32x512xf32>
      %42 = vector.broadcast %8 : vector<32x1xf32> to vector<32x512xf32>
      %43 = arith.mulf %42, %41 : vector<32x512xf32>
      %cst_9 = arith.constant dense<0.000000e+00> : vector<512xf32>
      %44 = vector.multi_reduction <add>, %43, %cst_9 [0] : vector<32x512xf32> to vector<512xf32>
      %45 = vector.shape_cast %44 : vector<512xf32> to vector<1x512xf32>
      %46 = vector.broadcast %9 : vector<32x1xf32> to vector<32x512xf32>
      %47 = arith.mulf %46, %41 : vector<32x512xf32>
      %cst_10 = arith.constant dense<0.000000e+00> : vector<512xf32>
      %48 = vector.multi_reduction <add>, %47, %cst_10 [0] : vector<32x512xf32> to vector<512xf32>
      %49 = vector.shape_cast %48 : vector<512xf32> to vector<1x512xf32>
      %50 = tpu.concatenate %45, %49 in 0 : vector<1x512xf32>, vector<1x512xf32> -> vector<2x512xf32>
      %51 = vector.broadcast %10 : vector<2x1xf32> to vector<2x512xf32>
      %52 = arith.addf %50, %51 : vector<2x512xf32>
      %53 = vector.broadcast %25 : vector<1x512xf32> to vector<2x512xf32>
      %54 = arith.mulf %53, %52 : vector<2x512xf32>
      %55 = arith.subf %arg6, %54 : vector<2x512xf32>
      %56 = vector.shape_cast %23 : vector<1x512xi1> to vector<1x512xi1>
      %57 = vector.broadcast %56 : vector<1x512xi1> to vector<2x512xi1>
      %58 = arith.select %57, %55, %arg6 : vector<2x512xi1>, vector<2x512xf32>
      scf.yield %58 : vector<2x512xf32>
    }
    %c0_5 = arith.constant 0 : index
    %c0_6 = arith.constant 0 : index
    %16 = vector.load %arg4[%c0_5, %c0_6] : memref<3x512xf32, #tpu.memory_space<vmem>>, vector<1x512xf32>
    tpu.vector_store %arg4[%c0_5, %c0_6], %1 {strides = array<i32>} : memref<3x512xf32, #tpu.memory_space<vmem>>, vector<1x512xf32>,
    %c1 = arith.constant 1 : index
    %c0_7 = arith.constant 0 : index
    %17 = vector.load %arg4[%c1, %c0_7] : memref<3x512xf32, #tpu.memory_space<vmem>>, vector<2x512xf32>
    tpu.vector_store %arg4[%c1, %c0_7], %15 {strides = array<i32>} : memref<3x512xf32, #tpu.memory_space<vmem>>, vector<2x512xf32>,
    return
  }
  func.func @transform_0(%arg0: i32, %arg1: memref<1xi32, #tpu.memory_space<smem>>) -> (i32, i32) {
    %c0_i32 = arith.constant 0 : i32
    %c0_i32_0 = arith.constant 0 : i32
    return %c0_i32, %arg0 : i32, i32
  }
  func.func @transform_1(%arg0: i32, %arg1: memref<1xi32, #tpu.memory_space<smem>>) -> (i32, i32) {
    %c0_i32 = arith.constant 0 : i32
    %c0_i32_0 = arith.constant 0 : i32
    %c0_i32_1 = arith.constant 0 : i32
    return %c0_i32, %c0_i32_0 : i32, i32
  }
  func.func @transform_2(%arg0: i32, %arg1: memref<1xi32, #tpu.memory_space<smem>>) -> (i32, i32) {
    %c0_i32 = arith.constant 0 : i32
    %c0_i32_0 = arith.constant 0 : i32
    return %c0_i32, %arg0 : i32, i32
  }
}

</mosaic_0001>

<llo_original>
// kernel: ode_flow.1
$region0: #{ode_flow.1}
  #allocation0 [shape = 'u32[]', space=smem, size = 0x4, offset = 0x4, fixed_abs, tag = 'smem constant byte address 0x4 - core index']
  #allocation1 [shape = 'u32[144,128]{1,0:T(1,128)}', space=vmem, size = 0x12000, scoped, tag = 'internal scratch']
  #allocation2 [shape = 's32[1]{0}', space=sflag, size = 0x4, scoped, tag = 'scoped memory for ode_flow.1']
  #allocation3 [shape = 's32[1]{0:T(128)S(6)}', space=smem, size = 0x200, scoped, tag = 'prefetched SMEM operand 0']
  %s0 = inlined_call_operand.<no memory space> [shape: s32[1], index: 0, kind: input, shape index: {}]
  %s1 = inlined_call_operand.vmem [shape: f32[3,1024], index: 1, kind: input, shape index: {}]
  %s2 = inlined_call_operand.vmem [shape: f32[32,7], index: 2, kind: input, shape index: {}]
  %s3 = inlined_call_operand.hbm [shape: f32[3,1024], index: 3, kind: output, shape index: {}]
  %s4 = sld [smem:[#allocation0]]
  $region48: #{ode_flow.1} parent=0
    _
  %s6 = ssub.s32 1, %s4
  %s7 = scalar_select 0, %s6, %s4
  %8 = sst [smem:[#allocation3]] %s0
  $region1: #{ode_flow.1} parent=0
    #allocation4 [shape = 'u8[16384]{0}', space=vmem, size = 0x4000, scoped, tag = 'output window, operand 0']
    #allocation5 [shape = 's32[2]{0}', space=sflag, size = 0x8, scoped, tag = 'scoped memory for ode_flow.1']
    %9 = vsyncpa [#allocation5], 0
    %s10 = scalar_lea.sflag [#allocation5], 1
    %11 = vsyncpa %s10, 0
    loop: start=0, step=1, limit=4
    $region2: #{ode_flow.1} parent=1 // loop_pre_header
      _
    $region3: #{ode_flow.1} parent=1 // loop_header
      %s13 = sphi 0, %s17
      %p14 = scmp.ge.s32.totalorder %s13, 4
      %s23 = sphi 0, %s25
      %s26 = sphi 0, %s23
      %s27 = sphi 0, %s26
      %s43 = sphi 0, %s27
      %s47 = sphi 0, %s47
      %s49 = sphi 0, %s47
      %s50 = sphi 0, %s49
      %s64 = sphi 0, %s50
      %s70 = sphi 0, %s72
      %s73 = sphi 0, %s70
      %s74 = sphi 0, %s73
      %s90 = sphi 0, %s74
    $region4: #{ode_flow.1} parent=1 // loop_header_branch
      %16 = sbr.rel (%p14) target = $region8
    $region5: #{ode_flow.1} parent=1 // loop_body
      %s18 = ssub.s32 %s13, 1
      %s19 = ssub.s32 %s13, 2
      %s20 = sadd.s32 %s13, 1
      %s21 = ssub.s32 %s13, %s20
      %p22 = scmp.eq.s32.totalorder %s21, 0
      %s24 = sadd.s32 %s23, 1
      %s25 = scalar_select %p22, %s23, %s24
      %p28 = pneg %p22
      %p29 = scmp.eq.s32.totalorder %s13, 1
      %p30 = por %p28, %p29
      %p31 = scmp.ne.s32.totalorder %s23, %s26
      %p32 = scmp.eq.s32.totalorder %s13, 0
      %p33 = por %p31, %p32
      %p34 = scmp.ne.s32.totalorder %s23, %s26
      %p35 = scmp.eq.s32.totalorder %s18, 1
      %p36 = por %p34, %p35
      %p37 = scmp.ne.s32.totalorder %s26, %s27
      %p38 = scmp.eq.s32.totalorder %s18, 0
      %p39 = por %p37, %p38
      %p40 = scmp.ne.s32.totalorder %s26, %s27
      %p41 = scmp.eq.s32.totalorder %s19, 1
      %p42 = por %p40, %p41
      %p44 = scmp.ne.s32.totalorder %s27, %s43
      %p45 = scmp.eq.s32.totalorder %s19, 0
      %p46 = por %p44, %p45
      %s48 = sadd.s32 %s47, 1
      %p51 = scmp.eq.s32.totalorder %s13, 1
      %p52 = scmp.ne.s32.totalorder %s47, %s49
      %p53 = scmp.eq.s32.totalorder %s13, 0
      %p54 = por %p52, %p53
      %p55 = scmp.ne.s32.totalorder %s47, %s49
      %p56 = scmp.eq.s32.totalorder %s18, 1
      %p57 = por %p55, %p56
      %p58 = scmp.ne.s32.totalorder %s49, %s50
      %p59 = scmp.eq.s32.totalorder %s18, 0
      %p60 = por %p58, %p59
      %p61 = scmp.ne.s32.totalorder %s49, %s50
      %p62 = scmp.eq.s32.totalorder %s19, 1
      %p63 = por %p61, %p62
      %p65 = scmp.ne.s32.totalorder %s50, %s64
      %p66 = scmp.eq.s32.totalorder %s19, 0
      %p67 = por %p65, %p66
      %s68 = ssub.s32 %s13, %s20
      %p69 = scmp.eq.s32.totalorder %s68, 0
      %s71 = sadd.s32 %s70, 1
      %s72 = scalar_select %p69, %s70, %s71
      %p75 = pneg %p69
      %p76 = scmp.eq.s32.totalorder %s13, 1
      %p77 = por %p75, %p76
      %p78 = scmp.ne.s32.totalorder %s70, %s73
      %p79 = scmp.eq.s32.totalorder %s13, 0
      %p80 = por %p78, %p79
      %p81 = scmp.ne.s32.totalorder %s70, %s73
      %p82 = scmp.eq.s32.totalorder %s18, 1
      %p83 = por %p81, %p82
      %p84 = scmp.ne.s32.totalorder %s73, %s74
      %p85 = scmp.eq.s32.totalorder %s18, 0
      %p86 = por %p84, %p85
      %p87 = scmp.ne.s32.totalorder %s73, %s74
      %p88 = scmp.eq.s32.totalorder %s19, 1
      %p89 = por %p87, %p88
      %p91 = scmp.ne.s32.totalorder %s74, %s90
      %p92 = scmp.eq.s32.totalorder %s19, 0
      %p93 = por %p91, %p92
      %p94 = scmp.le.s32.totalorder 1, %s13
      %p95 = scmp.lt.s32.totalorder %s13, 3
      %p96 = pnand %p94, %p95
      %p97 = pneg %p96
      // Predicated region
      $region9: #{ode_flow.1} parent=5 // pred_check
        _
      $region10: #{ode_flow.1} parent=5 // pred_check_branch
        %99 = sbr.rel (%p96) target = $region12
      $region11: #{ode_flow.1} parent=5 // pred_region
        %s100 = ssub.s32 %s13, 1
        // Predicated region
        $region13: #{ode_flow.1} parent=11 // pred_check
          %p101 = pneg %p60
        $region14: #{ode_flow.1} parent=11 // pred_check_branch
          %103 = sbr.rel (%p101) target = $region16
        $region15: #{ode_flow.1} parent=11 // pred_region
          _
        $region16: #{ode_flow.1} parent=11 // pred_fallthru
          _
      $region12: #{ode_flow.1} parent=5 // pred_fallthru
        _
      %p104 = scmp.lt.s32.totalorder %s13, 2
      // Predicated region
      $region17: #{ode_flow.1} parent=5 // pred_check
        %p105 = pneg %p104
      $region18: #{ode_flow.1} parent=5 // pred_check_branch
        %107 = sbr.rel (%p105) target = $region20
      $region19: #{ode_flow.1} parent=5 // pred_region
        // Predicated region
        $region21: #{ode_flow.1} parent=19 // pred_check
          %p108 = pneg %p33
        $region22: #{ode_flow.1} parent=19 // pred_check_branch
          %110 = sbr.rel (%p108) target = $region24
        $region23: #{ode_flow.1} parent=19 // pred_region
          %s111 = smul.u32 4, %s13
          %p112 = scmp.lt.s32.totalorder %s111, 7
          %s113 = scalar_select %p112, %s111, 7
          %s114 = smul.addr %s113, 4
          %s115 = scalar_lea.vmem %s1, %s114
          %s116 = smul.u32 4, %s13
        $region24: #{ode_flow.1} parent=19 // pred_fallthru
          _
      $region20: #{ode_flow.1} parent=5 // pred_fallthru
        _
      %p117 = scmp.le.s32.totalorder 1, %s13
      %p118 = scmp.lt.s32.totalorder %s13, 3
      %p119 = pnand %p117, %p118
      %p120 = pneg %p119
      // Predicated region
      $region25: #{ode_flow.1} parent=5 // pred_check
        _
      $region26: #{ode_flow.1} parent=5 // pred_check_branch
        %122 = sbr.rel (%p119) target = $region28
      $region27: #{ode_flow.1} parent=5 // pred_region
        %s123 = ssub.s32 %s13, 1
        %s124 = smul.u32 4, %s18
        %p125 = scmp.lt.s32.totalorder %s124, 7
        %s126 = scalar_select %p125, %s124, 7
        %s127 = smul.addr %s126, 4
        %s128 = scalar_lea.vmem %s1, %s127
        %p129 = pneg %p39
        %p130 = pneg %p36
        %p131 = pneg %p60
        %p132 = pneg %p57
        %p133 = pneg %p86
        %p134 = pneg %p83
        %s135 = sand.u32 %s73, 1
        %s136 = scalar_lea.sflag [#allocation5], %s135
        %s137 = sand.u32 %s73, 1
        %s138 = smul.addr %s137, 16
        %s139 = scalar_lea.vmem [#allocation4], %s138
        %s140 = smul.u32 4, %s18
        %p141 = scmp.lt.s32.totalorder %s140, 7
        %s142 = scalar_select %p141, %s140, 7
        %s143 = smul.addr %s142, 4
        %s144 = scalar_lea.vmem %s1, %s143
        %s145 = smul.u32 4, %s18
        %s146 = smul.u32 4, %s18
        %v147 = vld [vmem:[%s144] sm:$0x77]
        %v148 = vld [vmem:[%s144 + $0x8] sm:$0x77]
        %v149 = vld [vmem:[%s2] sm:$0xff]
        %v150 = vld [vmem:[%s2 + $0x8] sm:$0xff]
        %v151 = vld [vmem:[%s2 + $0x10] sm:$0xff]
        %v152 = vld [vmem:[%s2 + $0x18] sm:$0xff]
        %s153 = sld [smem:[#allocation3]]
        %p154 = scmp.gt.s32.totalorder %s153, 0
        %s155 = scalar_select %p154, %s153, 0
        %v158 = vcombine.high %v147, %v147
        %v159 = vcombine.high %v148, %v148
        %v160 = vrot.slane %v147, 1
        %v161 = vrot.slane %v158, 1
        %v162 = vrot.slane %v148, 1
        %v163 = vrot.slane %v159, 1
        // While loop
        $region29: #{ode_flow.1} parent=27 // loop_pre_header
          _
        $region30: #{ode_flow.1} parent=27 // loop_header
          %s169 = sphi 0, %s171
          %p170 = scmp.ge.s32.totalorder %s169, %s155
          %v174 = vphi %v160, %v670
          %v175 = vphi %v161, %v671
          %v176 = vphi %v162, %v672
          %v177 = vphi %v163, %v673
        $region31: #{ode_flow.1} parent=27 // loop_header_branch
          %173 = sbr.rel (%p170) target = $region35
        $region32: #{ode_flow.1} parent=27 // loop_body
          %s178 = scvt.s32.f32 %s169
          %s179 = smul.f32 %s178, 0.05
          %v180 = vstv %s179
          %v181 = vsub.f32 %v147, %v180
          %v182 = vsub.f32 %v148, %v180
          %vm183 = vcmp.gt.f32.partialorder %v181, 0.0
          %vm184 = vcmp.gt.f32.partialorder %v182, 0.0
          %v185 = vmin.f32 %v181, 0.05
          %v186 = vmin.f32 %v182, 0.05
          %188 = vset.pattern.permute.xlu0 0
          %189 = vperm.xlu0 %188, %v149
          %v190 = vpop.permute.xlu0 %189
          %193 = vset.pattern.permute.xlu0 0
          %194 = vperm.xlu0 %193, %v150
          %v195 = vpop.permute.xlu0 %194
          %198 = vset.pattern.permute.xlu0 0
          %199 = vperm.xlu0 %198, %v151
          %v200 = vpop.permute.xlu0 %199
          %203 = vset.pattern.permute.xlu0 0
          %204 = vperm.xlu0 %203, %v152
          %v205 = vpop.permute.xlu0 %204
          %v209 = vlaneseq
          %v210 = vshrl.u32 %v209, 7
          %v211 = vsub.s32 0, %v210
          %v212 = vrot.slane %v181, %v211
          %v213 = vlaneseq
          %v214 = vshrl.u32 %v213, 7
          %v215 = vsub.s32 4, %v214
          %v216 = vrot.slane %v181, %v215
          %v217 = vlaneseq
          %v218 = vshrl.u32 %v217, 7
          %v219 = vsub.s32 0, %v218
          %v220 = vrot.slane %v182, %v219
          %v221 = vlaneseq
          %v222 = vshrl.u32 %v221, 7
          %v223 = vsub.s32 4, %v222
          %v224 = vrot.slane %v182, %v223
          %v229 = vlaneseq
          %v230 = vshrl.u32 %v229, 7
          %v231 = vsub.s32 0, %v230
          %v232 = vrot.slane %v212, %v231
          %v233 = vlaneseq
          %v234 = vshrl.u32 %v233, 7
          %v235 = vsub.s32 0, %v234
          %v236 = vrot.slane %v216, %v235
          %v237 = vlaneseq
          %v238 = vshrl.u32 %v237, 7
          %v239 = vsub.s32 0, %v238
          %v240 = vrot.slane %v220, %v239
          %v241 = vlaneseq
          %v242 = vshrl.u32 %v241, 7
          %v243 = vsub.s32 0, %v242
          %v244 = vrot.slane %v224, %v243
          %v245 = vmul.f32 %v190, %v232
          %v246 = vmul.f32 %v190, %v236
          %v247 = vmul.f32 %v190, %v240
          %v248 = vmul.f32 %v190, %v244
          %v249 = vmul.f32 %v195, %v232
          %v250 = vmul.f32 %v195, %v236
          %v251 = vmul.f32 %v195, %v240
          %v252 = vmul.f32 %v195, %v244
          %v253 = vmul.f32 %v200, %v232
          %v254 = vmul.f32 %v200, %v236
          %v255 = vmul.f32 %v200, %v240
          %v256 = vmul.f32 %v200, %v244
          %v257 = vmul.f32 %v205, %v232
          %v258 = vmul.f32 %v205, %v236
          %v259 = vmul.f32 %v205, %v240
          %v260 = vmul.f32 %v205, %v244
          %261 = vset.pattern.permute.xlu0 3
          %262 = vperm.xlu0 %261, %v149
          %v263 = vpop.permute.xlu0 %262
          %265 = vset.pattern.permute.xlu0 3
          %266 = vperm.xlu0 %265, %v150
          %v267 = vpop.permute.xlu0 %266
          %269 = vset.pattern.permute.xlu0 3
          %270 = vperm.xlu0 %269, %v151
          %v271 = vpop.permute.xlu0 %270
          %273 = vset.pattern.permute.xlu0 3
          %274 = vperm.xlu0 %273, %v152
          %v275 = vpop.permute.xlu0 %274
          %v277 = vadd.f32 %v263, %v245
          %v278 = vadd.f32 %v263, %v246
          %v279 = vadd.f32 %v263, %v247
          %v280 = vadd.f32 %v263, %v248
          %v281 = vadd.f32 %v267, %v249
          %v282 = vadd.f32 %v267, %v250
          %v283 = vadd.f32 %v267, %v251
          %v284 = vadd.f32 %v267, %v252
          %v285 = vadd.f32 %v271, %v253
          %v286 = vadd.f32 %v271, %v254
          %v287 = vadd.f32 %v271, %v255
          %v288 = vadd.f32 %v271, %v256
          %v289 = vadd.f32 %v275, %v257
          %v290 = vadd.f32 %v275, %v258
          %v291 = vadd.f32 %v275, %v259
          %v292 = vadd.f32 %v275, %v260
          %293 = vset.pattern.permute.xlu0 1
          %294 = vperm.xlu0 %293, %v149
          %v295 = vpop.permute.xlu0 %294
          %297 = vset.pattern.permute.xlu0 1
          %298 = vperm.xlu0 %297, %v150
          %v299 = vpop.permute.xlu0 %298
          %301 = vset.pattern.permute.xlu0 1
          %302 = vperm.xlu0 %301, %v151
          %v303 = vpop.permute.xlu0 %302
          %305 = vset.pattern.permute.xlu0 1
          %306 = vperm.xlu0 %305, %v152
          %v307 = vpop.permute.xlu0 %306
          %v309 = vlaneseq
          %v310 = vshrl.u32 %v309, 7
          %v311 = vsub.s32 0, %v310
          %v312 = vrot.slane %v174, %v311
          %v313 = vlaneseq
          %v314 = vshrl.u32 %v313, 7
          %v315 = vsub.s32 0, %v314
          %v316 = vrot.slane %v175, %v315
          %v317 = vlaneseq
          %v318 = vshrl.u32 %v317, 7
          %v319 = vsub.s32 0, %v318
          %v320 = vrot.slane %v176, %v319
          %v321 = vlaneseq
          %v322 = vshrl.u32 %v321, 7
          %v323 = vsub.s32 0, %v322
          %v324 = vrot.slane %v177, %v323
          %v325 = vmul.f32 %v295, %v312
          %v326 = vmul.f32 %v295, %v316
          %v327 = vmul.f32 %v295, %v320
          %v328 = vmul.f32 %v295, %v324
          %v329 = vmul.f32 %v299, %v312
          %v330 = vmul.f32 %v299, %v316
          %v331 = vmul.f32 %v299, %v320
          %v332 = vmul.f32 %v299, %v324
          %v333 = vmul.f32 %v303, %v312
          %v334 = vmul.f32 %v303, %v316
          %v335 = vmul.f32 %v303, %v320
          %v336 = vmul.f32 %v303, %v324
          %v337 = vmul.f32 %v307, %v312
          %v338 = vmul.f32 %v307, %v316
          %v339 = vmul.f32 %v307, %v320
          %v340 = vmul.f32 %v307, %v324
          %v341 = vadd.f32 %v277, %v325
          %v342 = vadd.f32 %v278, %v326
          %v343 = vadd.f32 %v279, %v327
          %v344 = vadd.f32 %v280, %v328
          %v345 = vadd.f32 %v281, %v329
          %v346 = vadd.f32 %v282, %v330
          %v347 = vadd.f32 %v283, %v331
          %v348 = vadd.f32 %v284, %v332
          %v349 = vadd.f32 %v285, %v333
          %v350 = vadd.f32 %v286, %v334
          %v351 = vadd.f32 %v287, %v335
          %v352 = vadd.f32 %v288, %v336
          %v353 = vadd.f32 %v289, %v337
          %v354 = vadd.f32 %v290, %v338
          %v355 = vadd.f32 %v291, %v339
          %v356 = vadd.f32 %v292, %v340
          %357 = vset.pattern.permute.xlu0 2
          %358 = vperm.xlu0 %357, %v149
          %v359 = vpop.permute.xlu0 %358
          %361 = vset.pattern.permute.xlu0 2
          %362 = vperm.xlu0 %361, %v150
          %v363 = vpop.permute.xlu0 %362
          %365 = vset.pattern.permute.xlu0 2
          %366 = vperm.xlu0 %365, %v151
          %v367 = vpop.permute.xlu0 %366
          %369 = vset.pattern.permute.xlu0 2
          %370 = vperm.xlu0 %369, %v152
          %v371 = vpop.permute.xlu0 %370
          %v373 = vlaneseq
          %v374 = vshrl.u32 %v373, 7
          %v375 = vsub.s32 1, %v374
          %v376 = vrot.slane %v174, %v375
          %v377 = vlaneseq
          %v378 = vshrl.u32 %v377, 7
          %v379 = vsub.s32 1, %v378
          %v380 = vrot.slane %v175, %v379
          %v381 = vlaneseq
          %v382 = vshrl.u32 %v381, 7
          %v383 = vsub.s32 1, %v382
          %v384 = vrot.slane %v176, %v383
          %v385 = vlaneseq
          %v386 = vshrl.u32 %v385, 7
          %v387 = vsub.s32 1, %v386
          %v388 = vrot.slane %v177, %v387
          %v389 = vmul.f32 %v359, %v376
          %v390 = vmul.f32 %v359, %v380
          %v391 = vmul.f32 %v359, %v384
          %v392 = vmul.f32 %v359, %v388
          %v393 = vmul.f32 %v363, %v376
          %v394 = vmul.f32 %v363, %v380
          %v395 = vmul.f32 %v363, %v384
          %v396 = vmul.f32 %v363, %v388
          %v397 = vmul.f32 %v367, %v376
          %v398 = vmul.f32 %v367, %v380
          %v399 = vmul.f32 %v367, %v384
          %v400 = vmul.f32 %v367, %v388
          %v401 = vmul.f32 %v371, %v376
          %v402 = vmul.f32 %v371, %v380
          %v403 = vmul.f32 %v371, %v384
          %v404 = vmul.f32 %v371, %v388
          %v405 = vadd.f32 %v341, %v389
          %v406 = vadd.f32 %v342, %v390
          %v407 = vadd.f32 %v343, %v391
          %v408 = vadd.f32 %v344, %v392
          %v409 = vadd.f32 %v345, %v393
          %v410 = vadd.f32 %v346, %v394
          %v411 = vadd.f32 %v347, %v395
          %v412 = vadd.f32 %v348, %v396
          %v413 = vadd.f32 %v349, %v397
          %v414 = vadd.f32 %v350, %v398
          %v415 = vadd.f32 %v351, %v399
          %v416 = vadd.f32 %v352, %v400
          %v417 = vadd.f32 %v353, %v401
          %v418 = vadd.f32 %v354, %v402
          %v419 = vadd.f32 %v355, %v403
          %v420 = vadd.f32 %v356, %v404
          %v421 = vtanh.pop %v405
          %v422 = vtanh.pop %v406
          %v423 = vtanh.pop %v407
          %v424 = vtanh.pop %v408
          %v425 = vtanh.pop %v409
          %v426 = vtanh.pop %v410
          %v427 = vtanh.pop %v411
          %v428 = vtanh.pop %v412
          %v429 = vtanh.pop %v413
          %v430 = vtanh.pop %v414
          %v431 = vtanh.pop %v415
          %v432 = vtanh.pop %v416
          %v433 = vtanh.pop %v417
          %v434 = vtanh.pop %v418
          %v435 = vtanh.pop %v419
          %v436 = vtanh.pop %v420
          %437 = vset.pattern.permute.xlu0 4
          %438 = vperm.xlu0 %437, %v149
          %v439 = vpop.permute.xlu0 %438
          %441 = vset.pattern.permute.xlu0 4
          %442 = vperm.xlu0 %441, %v150
          %v443 = vpop.permute.xlu0 %442
          %445 = vset.pattern.permute.xlu0 4
          %446 = vperm.xlu0 %445, %v151
          %v447 = vpop.permute.xlu0 %446
          %449 = vset.pattern.permute.xlu0 4
          %450 = vperm.xlu0 %449, %v152
          %v451 = vpop.permute.xlu0 %450
          %v453 = vmul.f32 %v439, %v421
          %v454 = vmul.f32 %v439, %v422
          %v455 = vmul.f32 %v439, %v423
          %v456 = vmul.f32 %v439, %v424
          %v457 = vmul.f32 %v443, %v425
          %v458 = vmul.f32 %v443, %v426
          %v459 = vmul.f32 %v443, %v427
          %v460 = vmul.f32 %v443, %v428
          %v461 = vmul.f32 %v447, %v429
          %v462 = vmul.f32 %v447, %v430
          %v463 = vmul.f32 %v447, %v431
          %v464 = vmul.f32 %v447, %v432
          %v465 = vmul.f32 %v451, %v433
          %v466 = vmul.f32 %v451, %v434
          %v467 = vmul.f32 %v451, %v435
          %v468 = vmul.f32 %v451, %v436
          %v469 = vadd.f32 %v453, %v457
          %v470 = vadd.f32 %v469, %v461
          %v471 = vadd.f32 %v470, %v465
          %v472 = vrot.slane %v471, 4
          %v473 = vadd.f32 %v471, %v472
          %v474 = vrot.slane %v473, 2
          %v475 = vadd.f32 %v473, %v474
          %v476 = vrot.slane %v475, 1
          %v477 = vadd.f32 %v475, %v476
          %v478 = vadd.f32 %v454, %v458
          %v479 = vadd.f32 %v478, %v462
          %v480 = vadd.f32 %v479, %v466
          %v481 = vrot.slane %v480, 4
          %v482 = vadd.f32 %v480, %v481
          %v483 = vrot.slane %v482, 2
          %v484 = vadd.f32 %v482, %v483
          %v485 = vrot.slane %v484, 1
          %v486 = vadd.f32 %v484, %v485
          %v487 = vadd.f32 %v455, %v459
          %v488 = vadd.f32 %v487, %v463
          %v489 = vadd.f32 %v488, %v467
          %v490 = vrot.slane %v489, 4
          %v491 = vadd.f32 %v489, %v490
          %v492 = vrot.slane %v491, 2
          %v493 = vadd.f32 %v491, %v492
          %v494 = vrot.slane %v493, 1
          %v495 = vadd.f32 %v493, %v494
          %v496 = vadd.f32 %v456, %v460
          %v497 = vadd.f32 %v496, %v464
          %v498 = vadd.f32 %v497, %v468
          %v499 = vrot.slane %v498, 4
          %v500 = vadd.f32 %v498, %v499
          %v501 = vrot.slane %v500, 2
          %v502 = vadd.f32 %v500, %v501
          %v503 = vrot.slane %v502, 1
          %v504 = vadd.f32 %v502, %v503
          %505 = vset.pattern.permute.xlu0 5
          %506 = vperm.xlu0 %505, %v149
          %v507 = vpop.permute.xlu0 %506
          %509 = vset.pattern.permute.xlu0 5
          %510 = vperm.xlu0 %509, %v150
          %v511 = vpop.permute.xlu0 %510
          %513 = vset.pattern.permute.xlu0 5
          %514 = vperm.xlu0 %513, %v151
          %v515 = vpop.permute.xlu0 %514
          %517 = vset.pattern.permute.xlu0 5
          %518 = vperm.xlu0 %517, %v152
          %v519 = vpop.permute.xlu0 %518
          %v521 = vmul.f32 %v507, %v421
          %v522 = vmul.f32 %v507, %v422
          %v523 = vmul.f32 %v507, %v423
          %v524 = vmul.f32 %v507, %v424
          %v525 = vmul.f32 %v511, %v425
          %v526 = vmul.f32 %v511, %v426
          %v527 = vmul.f32 %v511, %v427
          %v528 = vmul.f32 %v511, %v428
          %v529 = vmul.f32 %v515, %v429
          %v530 = vmul.f32 %v515, %v430
          %v531 = vmul.f32 %v515, %v431
          %v532 = vmul.f32 %v515, %v432
          %v533 = vmul.f32 %v519, %v433
          %v534 = vmul.f32 %v519, %v434
          %v535 = vmul.f32 %v519, %v435
          %v536 = vmul.f32 %v519, %v436
          %v537 = vadd.f32 %v521, %v525
          %v538 = vadd.f32 %v537, %v529
          %v539 = vadd.f32 %v538, %v533
          %v540 = vrot.slane %v539, 4
          %v541 = vadd.f32 %v539, %v540
          %v542 = vrot.slane %v541, 2
          %v543 = vadd.f32 %v541, %v542
          %v544 = vrot.slane %v543, 1
          %v545 = vadd.f32 %v543, %v544
          %v546 = vadd.f32 %v522, %v526
          %v547 = vadd.f32 %v546, %v530
          %v548 = vadd.f32 %v547, %v534
          %v549 = vrot.slane %v548, 4
          %v550 = vadd.f32 %v548, %v549
          %v551 = vrot.slane %v550, 2
          %v552 = vadd.f32 %v550, %v551
          %v553 = vrot.slane %v552, 1
          %v554 = vadd.f32 %v552, %v553
          %v555 = vadd.f32 %v523, %v527
          %v556 = vadd.f32 %v555, %v531
          %v557 = vadd.f32 %v556, %v535
          %v558 = vrot.slane %v557, 4
          %v559 = vadd.f32 %v557, %v558
          %v560 = vrot.slane %v559, 2
          %v561 = vadd.f32 %v559, %v560
          %v562 = vrot.slane %v561, 1
          %v563 = vadd.f32 %v561, %v562
          %v564 = vadd.f32 %v524, %v528
          %v565 = vadd.f32 %v564, %v532
          %v566 = vadd.f32 %v565, %v536
          %v567 = vrot.slane %v566, 4
          %v568 = vadd.f32 %v566, %v567
          %v569 = vrot.slane %v568, 2
          %v570 = vadd.f32 %v568, %v569
          %v571 = vrot.slane %v570, 1
          %v572 = vadd.f32 %v570, %v571
          %vm573 = vcmask 1040384
          %v574 = vsel %vm573, %v477, %v545
          %v575 = vsel %vm573, %v486, %v554
          %v576 = vsel %vm573, %v495, %v563
          %v577 = vsel %vm573, %v504, %v572
          %578 = vset.pattern.permute.xlu0 6
          %579 = vperm.xlu0 %578, %v149
          %v580 = vpop.permute.xlu0 %579
          %v582 = vadd.f32 %v574, %v580
          %v583 = vadd.f32 %v575, %v580
          %v584 = vadd.f32 %v576, %v580
          %v585 = vadd.f32 %v577, %v580
          %v588 = vlaneseq
          %v589 = vshrl.u32 %v588, 7
          %v590 = vsub.s32 0, %v589
          %v591 = vrot.slane %v185, %v590
          %v592 = vlaneseq
          %v593 = vshrl.u32 %v592, 7
          %v594 = vsub.s32 4, %v593
          %v595 = vrot.slane %v185, %v594
          %v596 = vlaneseq
          %v597 = vshrl.u32 %v596, 7
          %v598 = vsub.s32 0, %v597
          %v599 = vrot.slane %v186, %v598
          %v600 = vlaneseq
          %v601 = vshrl.u32 %v600, 7
          %v602 = vsub.s32 4, %v601
          %v603 = vrot.slane %v186, %v602
          %v608 = vlaneseq
          %v609 = vshrl.u32 %v608, 7
          %v610 = vsub.s32 0, %v609
          %v611 = vrot.slane %v591, %v610
          %v612 = vlaneseq
          %v613 = vshrl.u32 %v612, 7
          %v614 = vsub.s32 0, %v613
          %v615 = vrot.slane %v595, %v614
          %v616 = vlaneseq
          %v617 = vshrl.u32 %v616, 7
          %v618 = vsub.s32 0, %v617
          %v619 = vrot.slane %v599, %v618
          %v620 = vlaneseq
          %v621 = vshrl.u32 %v620, 7
          %v622 = vsub.s32 0, %v621
          %v623 = vrot.slane %v603, %v622
          %v624 = vmul.f32 %v611, %v582
          %v625 = vmul.f32 %v615, %v583
          %v626 = vmul.f32 %v619, %v584
          %v627 = vmul.f32 %v623, %v585
          %v628 = vsub.f32 %v174, %v624
          %v629 = vsub.f32 %v175, %v625
          %v630 = vsub.f32 %v176, %v626
          %v631 = vsub.f32 %v177, %v627
          %v632 = vsel %vm183, 1, 0
          %v633 = vsel %vm184, 1, 0
          %v634 = vlaneseq
          %v635 = vshrl.u32 %v634, 7
          %v636 = vsub.s32 0, %v635
          %v637 = vrot.slane %v632, %v636
          %v638 = vlaneseq
          %v639 = vshrl.u32 %v638, 7
          %v640 = vsub.s32 4, %v639
          %v641 = vrot.slane %v632, %v640
          %v642 = vlaneseq
          %v643 = vshrl.u32 %v642, 7
          %v644 = vsub.s32 0, %v643
          %v645 = vrot.slane %v633, %v644
          %v646 = vlaneseq
          %v647 = vshrl.u32 %v646, 7
          %v648 = vsub.s32 4, %v647
          %v649 = vrot.slane %v633, %v648
          %v650 = vlaneseq
          %v651 = vshrl.u32 %v650, 7
          %v652 = vsub.s32 0, %v651
          %v653 = vrot.slane %v637, %v652
          %v654 = vlaneseq
          %v655 = vshrl.u32 %v654, 7
          %v656 = vsub.s32 0, %v655
          %v657 = vrot.slane %v641, %v656
          %v658 = vlaneseq
          %v659 = vshrl.u32 %v658, 7
          %v660 = vsub.s32 0, %v659
          %v661 = vrot.slane %v645, %v660
          %v662 = vlaneseq
          %v663 = vshrl.u32 %v662, 7
          %v664 = vsub.s32 0, %v663
          %v665 = vrot.slane %v649, %v664
          %vm666 = vcmp.eq.s32.totalorder %v653, 1
          %vm667 = vcmp.eq.s32.totalorder %v657, 1
          %vm668 = vcmp.eq.s32.totalorder %v661, 1
          %vm669 = vcmp.eq.s32.totalorder %v665, 1
          %v670 = vsel %vm666, %v628, %v174
          %v671 = vsel %vm667, %v629, %v175
          %v672 = vsel %vm668, %v630, %v176
          %v673 = vsel %vm669, %v631, %v177
        $region33: #{ode_flow.1} parent=27 // loop_footer
          %s171 = sadd.s32 %s169, 1
        $region34: #{ode_flow.1} parent=27 // loop_footer_branch
          %168 = sbr.rel target = $region30
        $region35: #{ode_flow.1} parent=27 // loop_exit
          _
        %v675 = vunpack.c.l.s4 1966171168
        %v676 = vunpack.c.0.s8 %v675
        %v677 = vlaneseq
        %v678 = vshrl.u32 %v677, 7
        %v679 = vsub.s32 %v676, %v678
        %v680 = vrot.slane %v147, %v679
        %v682 = vunpack.c.l.s4 1966171168
        %v683 = vunpack.c.0.s8 %v682
        %v684 = vlaneseq
        %v685 = vshrl.u32 %v684, 7
        %v686 = vsub.s32 %v683, %v685
        %v687 = vrot.slane %v148, %v686
        %v688 = vcombine.low %v680, %v687
        %v690 = vunpack.c.l.s4 1966171168
        %v691 = vunpack.c.0.s8 %v690
        %v692 = vlaneseq
        %v693 = vshrl.u32 %v692, 7
        %v694 = vsub.s32 %v691, %v693
        %v695 = vrot.slane %v688, %v694
        %v697 = vlaneseq
        %vm698 = vcmp.ge.s32.totalorder %v697, 0
        %vm699 = vcmp.lt.s32.totalorder %v697, 512
        %vm700 = vmand %vm698, %vm699
        %701 = vst.msk [vmem:[%s139] ss:$4 sm:$0xf] %vm700, %v695
        %v706 = vcombine.low %v174, %v175
        %v707 = vcombine.low %v176, %v177
        %v708 = vrot.slane %v706, 7
        %v709 = vrot.slane %v707, 7
        %712 = vst [vmem:[%s139] sm:$0x66] %v708
        %713 = vst [vmem:[%s139 + $0x8] sm:$0x66] %v709
        %s714 = sand.u32 %s73, 1
        %s715 = scalar_lea.sflag [#allocation5], %s714
        %s716 = sand.u32 %s73, 1
        %s717 = smul.addr %s716, 16
        %s718 = scalar_lea.vmem [#allocation4], %s717
        // Predicated region
        $region36: #{ode_flow.1} parent=27 // pred_check
          %p719 = pneg %p83
        $region37: #{ode_flow.1} parent=27 // pred_check_branch
          %721 = sbr.rel (%p719) target = $region39
        $region38: #{ode_flow.1} parent=27 // pred_region
          %s722 = smul.u32 4, %s18
          %s724 = ssub.s32 256, 256
          %725 = vsyncadd %s715, %s724
          %s726 = smul.addr %s722, 64
          %s727 = scalar_lea.hbm %s3, %s726
          %s729 = sshll.u32 %s718, 4
          %s730 = int_to_ptr.vmem [resolvable:$true] %s729
          %732 = dma.vmem_to_hbm [thread:$0]  %s730, 256, %s727, %s715
        $region39: #{ode_flow.1} parent=27 // pred_fallthru
          _
      $region28: #{ode_flow.1} parent=5 // pred_fallthru
        _
      %p733 = scmp.le.s32.totalorder 2, %s13
      // Predicated region
      $region40: #{ode_flow.1} parent=5 // pred_check
        %p734 = pneg %p733
      $region41: #{ode_flow.1} parent=5 // pred_check_branch
        %736 = sbr.rel (%p734) target = $region43
      $region42: #{ode_flow.1} parent=5 // pred_region
        %s737 = ssub.s32 %s13, 2
        // Predicated region
        $region44: #{ode_flow.1} parent=42 // pred_check
          %p738 = pneg %p89
        $region45: #{ode_flow.1} parent=42 // pred_check_branch
          %740 = sbr.rel (%p738) target = $region47
        $region46: #{ode_flow.1} parent=42 // pred_region
          %s741 = sand.u32 %s74, 1
          %s742 = scalar_lea.sflag [#allocation5], %s741
          %s743 = sand.u32 %s74, 1
          %s744 = smul.addr %s743, 16
          %s745 = scalar_lea.vmem [#allocation4], %s744
          %746 = dma.done %s742, 256
        $region47: #{ode_flow.1} parent=42 // pred_fallthru
          _
      $region43: #{ode_flow.1} parent=5 // pred_fallthru
        _
    $region6: #{ode_flow.1} parent=1 // loop_footer
      %s17 = sadd.s32 1, %s13
    $region7: #{ode_flow.1} parent=1 // loop_footer_branch
      %12 = sbr.rel target = $region3
    $region8: #{ode_flow.1} parent=1 // loop_exit
      _
    %747 = vsyncpa [#allocation5], 1
    %s748 = scalar_lea.sflag [#allocation5], 1
    %749 = vsyncpa %s748, 1

</llo_original>
